<compile_context>
chip_gen: v6e
topology: v6e:2x2x1
jax: 0.10.0
libtpu: 0.0.40
codegen_flags: <defaults>
</compile_context>

<pallas_src>
import numpy as np
import jax
import jax.numpy as jnp
from jax.experimental import pallas as pl
from jax.experimental.pallas import tpu as pltpu


def _encoder_kernel(x_ref, w_ref, o_ref):
    # x_ref: (B, N) full F_genus block (resident across grid steps)
    # w_ref: (N, tn) column tile of the fused, interleaved membership matrix (bf16)
    # o_ref: (B, tn) lane-dense output tile
    w = w_ref[...].astype(jnp.float32)          # bf16 0/1 -> f32, exact
    o_ref[...] = jnp.dot(x_ref[...], w, preferred_element_type=jnp.float32)


def encoder_forward(x, w_big):
    """x: (B, N) float32; w_big: (N, (R+1)*N) interleaved membership matrix
    (bf16; entries are exactly 0/1, last interleaved slot is the identity).

    Returns (B, N, R+1) float32, matching PyTorch Encoder.forward.
    """
    B, N = x.shape
    M = w_big.shape[1]
    assert M % N == 0
    Rp1 = M // N

    # Split the fused lane dim across 2 "parallel" grid steps when possible so
    # v7x can shard them over its 2 TensorCores; each tile stays a multiple of
    # 128 lanes.  On 1-TC chips this is a negligible extra grid step.
    num_col_tiles = 2 if (M % 256 == 0) else 1
    tn = M // num_col_tiles

    out_flat = pl.pallas_call(
        _encoder_kernel,
        out_shape=jax.ShapeDtypeStruct((B, M), jnp.float32),
        grid_spec=pltpu.PrefetchScalarGridSpec(
            num_scalar_prefetch=0,
            grid=(num_col_tiles,),
            in_specs=[
                pl.BlockSpec((B, N), lambda j: (0, 0)),    # F_genus, resident
                pl.BlockSpec((N, tn), lambda j: (0, j)),   # fused-W column tile
            ],
            out_specs=pl.BlockSpec((B, tn), lambda j: (0, j)),
        ),
        compiler_params=pltpu.CompilerParams(
            dimension_semantics=("parallel",)),
    )(x, w_big)

    # Free row-major reshape: column i*(R+1)+r holds the rank-r value of taxon i.
    return out_flat.reshape(B, N, Rp1)


def build_phylogeny_W(key, n_taxa, ranks_cardinality):
    """Rank membership matrices, mirroring Encoder.get_W.

    Returns (R+1, N, N) float32 with an identity appended as the last slice
    (stands in for the raw F_genus passthrough of the concat).
    """
    ws = []
    for n_cats in ranks_cardinality:
        key, sub = jax.random.split(key)
        labels = jax.random.randint(sub, (n_taxa,), 0, n_cats)
        w = (labels[:, None] == labels[None, :]).astype(jnp.float32)
        ws.append(w)
    ws.append(jnp.eye(n_taxa, dtype=jnp.float32))
    return jnp.stack(ws, axis=0)


def interleave_w(w_stack):
    """(R+1, N, N) -> (N, (R+1)*N) bf16 with W_big[:, i*(R+1)+r] = w_stack[r][:, i].

    This column interleaving makes the kernel's (B, (R+1)*N) output reshape
    row-major directly into the torch (B, N, R+1) layout.  bf16 is exact for
    the 0/1 membership values.
    """
    Rp1, N, _ = w_stack.shape
    return jnp.transpose(w_stack, (1, 2, 0)).reshape(N, N * Rp1).astype(jnp.bfloat16)


if __name__ == "__main__":
    B = 4                                    # batch
    N = 128                                  # number of genus-level taxa
    ranks_cardinality = [3, 5, 8, 16, 32]    # e.g. phylum..family coarse->fine
    R = len(ranks_cardinality)

    key = jax.random.PRNGKey(0)
    key, kx, kw = jax.random.split(key, 3)

    x = jax.random.uniform(kx, (B, N), dtype=jnp.float32)
    w_stack = build_phylogeny_W(kw, N, ranks_cardinality)   # (R+1, N, N) f32
    w_big = interleave_w(w_stack)                           # (N, (R+1)*N) bf16

    out = encoder_forward(x, w_big)
    out = jax.block_until_ready(out)

    # Reference check against plain JAX (same semantics as the torch module).
    ref_slices = [x @ w_stack[r] for r in range(R)] + [x]
    ref = jnp.stack(ref_slices, axis=2)
    assert out.shape == (B, N, R + 1), out.shape
    np.testing.assert_allclose(np.asarray(out), np.asarray(ref), rtol=1e-5, atol=1e-5)

    print("KERNEL_OK")
</pallas_src>

<mosaic_0001>
module attributes {stable_mosaic.version = 11 : i64} {
  func.func @_encoder_kernel(%arg0: i32, %arg1: memref<4x128xf32, #tpu.memory_space<vmem>>, %arg2: memref<128x384xbf16, #tpu.memory_space<vmem>>, %arg3: memref<4x384xf32, #tpu.memory_space<vmem>>) attributes {dimension_semantics = [#tpu.dimension_semantics<parallel>], iteration_bounds = array<i64: 2>, scalar_prefetch = 0 : i64, scratch_operands = 0 : i64, tpu.core_type = #tpu.core_type<tc>, window_params = [{pipeline_mode = #tpu.pipeline_mode<synchronous>, transform_indices = @transform_0, window_bounds = array<i64: 4, 128>}, {transform_indices = @transform_1, window_bounds = array<i64: 128, 384>}, {transform_indices = @transform_2, window_bounds = array<i64: 4, 384>}]} {
    %c0 = arith.constant 0 : index
    %c0_0 = arith.constant 0 : index
    %0 = vector.load %arg2[%c0, %c0_0] : memref<128x384xbf16, #tpu.memory_space<vmem>>, vector<128x384xbf16>
    %1 = arith.extf %0 : vector<128x384xbf16> to vector<128x384xf32>
    %c0_1 = arith.constant 0 : index
    %c0_2 = arith.constant 0 : index
    %2 = vector.load %arg1[%c0_1, %c0_2] : memref<4x128xf32, #tpu.memory_space<vmem>>, vector<4x128xf32>
    %cst = arith.constant dense<0.000000e+00> : vector<4x384xf32>
    %3 = tpu.matmul %2, %1, %cst {dimension_numbers = #tpu.dot_dimension_numbers<[1], [0], [0], [1], [0, 0, 1, 1], [], []>} : vector<4x128xf32>, vector<128x384xf32>, vector<4x384xf32> -> vector<4x384xf32>
    %c0_3 = arith.constant 0 : index
    %c0_4 = arith.constant 0 : index
    %4 = vector.load %arg3[%c0_3, %c0_4] : memref<4x384xf32, #tpu.memory_space<vmem>>, vector<4x384xf32>
    tpu.vector_store %arg3[%c0_3, %c0_4], %3 {strides = array<i32>} : memref<4x384xf32, #tpu.memory_space<vmem>>, vector<4x384xf32>,
    return
  }
  func.func @transform_0(%arg0: i32) -> (i32, i32) {
    %c0_i32 = arith.constant 0 : i32
    %c0_i32_0 = arith.constant 0 : i32
    %c0_i32_1 = arith.constant 0 : i32
    return %c0_i32, %c0_i32_0 : i32, i32
  }
  func.func @transform_1(%arg0: i32) -> (i32, i32) {
    %c0_i32 = arith.constant 0 : i32
    %c0_i32_0 = arith.constant 0 : i32
    return %c0_i32, %arg0 : i32, i32
  }
  func.func @transform_2(%arg0: i32) -> (i32, i32) {
    %c0_i32 = arith.constant 0 : i32
    %c0_i32_0 = arith.constant 0 : i32
    return %c0_i32, %arg0 : i32, i32
  }
}

</mosaic_0001>

<llo_original>
// kernel: tpu_custom_call.1
$region0: #{tpu_custom_call.1}
  #allocation0 [shape = 'u32[]', space=smem, size = 0x4, offset = 0x4, fixed_abs, tag = 'smem constant byte address 0x4 - core index']
  #allocation1 [shape = 'u32[144,128]{1,0:T(1,128)}', space=vmem, size = 0x12000, scoped, tag = 'internal scratch']
  %s0 = inlined_call_operand.hbm [shape: f32[4,128], index: 0, kind: input, shape index: {}]
  %s1 = inlined_call_operand.hbm [shape: bf16[128,768], index: 1, kind: input, shape index: {}]
  %s2 = inlined_call_operand.hbm [shape: f32[4,768], index: 2, kind: output, shape index: {}]
  %s3 = sld [smem:[#allocation0]]
  $region49: #{tpu_custom_call.1} parent=0
    _
  %s5 = ssub.s32 1, %s3
  %s6 = scalar_select 0, %s5, %s3
  $region1: #{tpu_custom_call.1} parent=0
    #allocation2 [shape = 'u8[2048]{0}', space=vmem, size = 0x800, scoped, tag = 'input window, operand 0, single buffered']
    #allocation3 [shape = 's32[2]{0}', space=sflag, size = 0x8, scoped, tag = 'scoped memory for tpu_custom_call.1']
    #allocation4 [shape = 's32[2]{0}', space=sflag, size = 0x8, scoped, tag = 'scoped memory for tpu_custom_call.1']
    #allocation5 [shape = 'u8[196608]{0}', space=vmem, size = 0x30000, scoped, tag = 'input window, operand 1']
    #allocation6 [shape = 's32[2]{0}', space=sflag, size = 0x8, scoped, tag = 'scoped memory for tpu_custom_call.1']
    #allocation7 [shape = 'u8[12288]{0}', space=vmem, size = 0x3000, scoped, tag = 'output window, operand 0']
    %7 = vsyncpa [#allocation3], 0
    %8 = vsyncpa [#allocation6], 0
    %s9 = scalar_lea.sflag [#allocation6], 1
    %10 = vsyncpa %s9, 0
    %11 = vsyncpa [#allocation4], 0
    %s12 = scalar_lea.sflag [#allocation4], 1
    %13 = vsyncpa %s12, 0
    loop: start=0, step=1, limit=4
    $region2: #{tpu_custom_call.1} parent=1 // loop_pre_header
      _
    $region3: #{tpu_custom_call.1} parent=1 // loop_header
      %s15 = sphi 0, %s19
      %p16 = scmp.ge.s32.totalorder %s15, 4
      %s23 = sphi 0, %s23
      %s25 = sphi 0, %s23
      %s26 = sphi 0, %s25
      %s40 = sphi 0, %s26
      %s46 = sphi 0, %s48
      %s49 = sphi 0, %s46
      %s50 = sphi 0, %s49
      %s66 = sphi 0, %s50
      %s72 = sphi 0, %s74
      %s75 = sphi 0, %s72
      %s76 = sphi 0, %s75
      %s92 = sphi 0, %s76
    $region4: #{tpu_custom_call.1} parent=1 // loop_header_branch
      %18 = sbr.rel (%p16) target = $region8
    $region5: #{tpu_custom_call.1} parent=1 // loop_body
      %s20 = ssub.s32 %s15, 1
      %s21 = ssub.s32 %s15, 2
      %s22 = sadd.s32 %s15, 1
      %s24 = sadd.s32 %s23, 1
      %p27 = scmp.eq.s32.totalorder %s15, 1
      %p28 = scmp.ne.s32.totalorder %s23, %s25
      %p29 = scmp.eq.s32.totalorder %s15, 0
      %p30 = por %p28, %p29
      %p31 = scmp.ne.s32.totalorder %s23, %s25
      %p32 = scmp.eq.s32.totalorder %s20, 1
      %p33 = por %p31, %p32
      %p34 = scmp.ne.s32.totalorder %s25, %s26
      %p35 = scmp.eq.s32.totalorder %s20, 0
      %p36 = por %p34, %p35
      %p37 = scmp.ne.s32.totalorder %s25, %s26
      %p38 = scmp.eq.s32.totalorder %s21, 1
      %p39 = por %p37, %p38
      %p41 = scmp.ne.s32.totalorder %s26, %s40
      %p42 = scmp.eq.s32.totalorder %s21, 0
      %p43 = por %p41, %p42
      %s44 = ssub.s32 %s15, %s22
      %p45 = scmp.eq.s32.totalorder %s44, 0
      %s47 = sadd.s32 %s46, 1
      %s48 = scalar_select %p45, %s46, %s47
      %p51 = pneg %p45
      %p52 = scmp.eq.s32.totalorder %s15, 1
      %p53 = por %p51, %p52
      %p54 = scmp.ne.s32.totalorder %s46, %s49
      %p55 = scmp.eq.s32.totalorder %s15, 0
      %p56 = por %p54, %p55
      %p57 = scmp.ne.s32.totalorder %s46, %s49
      %p58 = scmp.eq.s32.totalorder %s20, 1
      %p59 = por %p57, %p58
      %p60 = scmp.ne.s32.totalorder %s49, %s50
      %p61 = scmp.eq.s32.totalorder %s20, 0
      %p62 = por %p60, %p61
      %p63 = scmp.ne.s32.totalorder %s49, %s50
      %p64 = scmp.eq.s32.totalorder %s21, 1
      %p65 = por %p63, %p64
      %p67 = scmp.ne.s32.totalorder %s50, %s66
      %p68 = scmp.eq.s32.totalorder %s21, 0
      %p69 = por %p67, %p68
      %s70 = ssub.s32 %s15, %s22
      %p71 = scmp.eq.s32.totalorder %s70, 0
      %s73 = sadd.s32 %s72, 1
      %s74 = scalar_select %p71, %s72, %s73
      %p77 = pneg %p71
      %p78 = scmp.eq.s32.totalorder %s15, 1
      %p79 = por %p77, %p78
      %p80 = scmp.ne.s32.totalorder %s72, %s75
      %p81 = scmp.eq.s32.totalorder %s15, 0
      %p82 = por %p80, %p81
      %p83 = scmp.ne.s32.totalorder %s72, %s75
      %p84 = scmp.eq.s32.totalorder %s20, 1
      %p85 = por %p83, %p84
      %p86 = scmp.ne.s32.totalorder %s75, %s76
      %p87 = scmp.eq.s32.totalorder %s20, 0
      %p88 = por %p86, %p87
      %p89 = scmp.ne.s32.totalorder %s75, %s76
      %p90 = scmp.eq.s32.totalorder %s21, 1
      %p91 = por %p89, %p90
      %p93 = scmp.ne.s32.totalorder %s76, %s92
      %p94 = scmp.eq.s32.totalorder %s21, 0
      %p95 = por %p93, %p94
      %p96 = scmp.le.s32.totalorder 1, %s15
      %p97 = scmp.lt.s32.totalorder %s15, 3
      %p98 = pnand %p96, %p97
      %p99 = pneg %p98
      // Predicated region
      $region9: #{tpu_custom_call.1} parent=5 // pred_check
        _
      $region10: #{tpu_custom_call.1} parent=5 // pred_check_branch
        %101 = sbr.rel (%p98) target = $region12
      $region11: #{tpu_custom_call.1} parent=5 // pred_region
        %s102 = ssub.s32 %s15, 1
        // Predicated region
        $region13: #{tpu_custom_call.1} parent=11 // pred_check
          %p103 = pneg %p36
        $region14: #{tpu_custom_call.1} parent=11 // pred_check_branch
          %105 = sbr.rel (%p103) target = $region16
        $region15: #{tpu_custom_call.1} parent=11 // pred_region
          %s107 = ssub.s32 64, 64
          %108 = vsyncadd [#allocation3], %s107
          %s110 = sshll.u32 [#allocation2], 4
          %s111 = int_to_ptr.vmem [resolvable:$true] %s110
          %113 = dma.hbm_to_vmem [thread:$0]  %s0, 64, %s111, [#allocation3]
        $region16: #{tpu_custom_call.1} parent=11 // pred_fallthru
          _
      $region12: #{tpu_custom_call.1} parent=5 // pred_fallthru
        _
      %p114 = scmp.lt.s32.totalorder %s15, 2
      // Predicated region
      $region17: #{tpu_custom_call.1} parent=5 // pred_check
        %p115 = pneg %p114
      $region18: #{tpu_custom_call.1} parent=5 // pred_check_branch
        %117 = sbr.rel (%p115) target = $region20
      $region19: #{tpu_custom_call.1} parent=5 // pred_region
        // Predicated region
        $region21: #{tpu_custom_call.1} parent=19 // pred_check
          %p118 = pneg %p56
        $region22: #{tpu_custom_call.1} parent=19 // pred_check_branch
          %120 = sbr.rel (%p118) target = $region24
        $region23: #{tpu_custom_call.1} parent=19 // pred_region
          %s121 = sand.u32 %s46, 1
          %s122 = scalar_lea.sflag [#allocation6], %s121
          %s123 = sand.u32 %s46, 1
          %s124 = smul.addr %s123, 192
          %s125 = scalar_lea.vmem [#allocation5], %s124
          %s126 = smul.u32 3, %s15
          %s128 = ssub.s32 3072, 3072
          %129 = vsyncadd %s122, %s128
          %s130 = smul.addr %s126, 64
          %s131 = scalar_lea.hbm %s1, %s130
          %s132 = sshll.u32 %s125, 4
          %s133 = int_to_ptr.vmem [resolvable:$true] %s132
          %138 = dma.hbm_to_vmem [thread:$0]  %s131, 3072, %s133, %s122, 384, 192, 12
        $region24: #{tpu_custom_call.1} parent=19 // pred_fallthru
          _
      $region20: #{tpu_custom_call.1} parent=5 // pred_fallthru
        _
      %p139 = scmp.le.s32.totalorder 1, %s15
      %p140 = scmp.lt.s32.totalorder %s15, 3
      %p141 = pnand %p139, %p140
      %p142 = pneg %p141
      // Predicated region
      $region25: #{tpu_custom_call.1} parent=5 // pred_check
        _
      $region26: #{tpu_custom_call.1} parent=5 // pred_check_branch
        %144 = sbr.rel (%p141) target = $region28
      $region27: #{tpu_custom_call.1} parent=5 // pred_region
        %s145 = ssub.s32 %s15, 1
        // Predicated region
        $region29: #{tpu_custom_call.1} parent=27 // pred_check
          %p146 = pneg %p36
        $region30: #{tpu_custom_call.1} parent=27 // pred_check_branch
          %148 = sbr.rel (%p146) target = $region32
        $region31: #{tpu_custom_call.1} parent=27 // pred_region
          %149 = dma.done [#allocation3], 64
        $region32: #{tpu_custom_call.1} parent=27 // pred_fallthru
          _
        %s150 = sand.u32 %s49, 1
        %s151 = scalar_lea.sflag [#allocation6], %s150
        %s152 = sand.u32 %s49, 1
        %s153 = smul.addr %s152, 192
        %s154 = scalar_lea.vmem [#allocation5], %s153
        // Predicated region
        $region33: #{tpu_custom_call.1} parent=27 // pred_check
          %p155 = pneg %p62
        $region34: #{tpu_custom_call.1} parent=27 // pred_check_branch
          %157 = sbr.rel (%p155) target = $region36
        $region35: #{tpu_custom_call.1} parent=27 // pred_region
          %158 = dma.done %s151, 3072
        $region36: #{tpu_custom_call.1} parent=27 // pred_fallthru
          _
        %p159 = pneg %p36
        %p160 = pneg %p33
        %s161 = sand.u32 %s49, 1
        %s162 = scalar_lea.sflag [#allocation6], %s161
        %s163 = sand.u32 %s49, 1
        %s164 = smul.addr %s163, 192
        %s165 = scalar_lea.vmem [#allocation5], %s164
        %p166 = pneg %p62
        %p167 = pneg %p59
        %p168 = pneg %p88
        %p169 = pneg %p85
        %s170 = sand.u32 %s75, 1
        %s171 = scalar_lea.sflag [#allocation4], %s170
        %s172 = sand.u32 %s75, 1
        %s173 = smul.addr %s172, 12
        %s174 = scalar_lea.vmem [#allocation7], %s173
        %s175 = smul.u32 3, %s20
        %s176 = smul.u32 3, %s20
        %v177 = vld [vmem:[%s154] sm:$0xff]
        %v178 = vld [vmem:[%s154 + $0x8] sm:$0xf]
        %v179 = vld [vmem:[%s154 + $0xc] sm:$0xff]
        %v180 = vld [vmem:[%s154 + $0x14] sm:$0xf]
        %v181 = vld [vmem:[%s154 + $0x18] sm:$0xff]
        %v182 = vld [vmem:[%s154 + $0x20] sm:$0xf]
        %v183 = vld [vmem:[%s154 + $0x24] sm:$0xff]
        %v184 = vld [vmem:[%s154 + $0x2c] sm:$0xf]
        %v185 = vld [vmem:[%s154 + $0x30] sm:$0xff]
        %v186 = vld [vmem:[%s154 + $0x38] sm:$0xf]
        %v187 = vld [vmem:[%s154 + $0x3c] sm:$0xff]
        %v188 = vld [vmem:[%s154 + $0x44] sm:$0xf]
        %v189 = vld [vmem:[%s154 + $0x48] sm:$0xff]
        %v190 = vld [vmem:[%s154 + $0x50] sm:$0xf]
        %v191 = vld [vmem:[%s154 + $0x54] sm:$0xff]
        %v192 = vld [vmem:[%s154 + $0x5c] sm:$0xf]
        %v193 = vld [vmem:[%s154 + $0x60] sm:$0xff]
        %v194 = vld [vmem:[%s154 + $0x68] sm:$0xf]
        %v195 = vld [vmem:[%s154 + $0x6c] sm:$0xff]
        %v196 = vld [vmem:[%s154 + $0x74] sm:$0xf]
        %v197 = vld [vmem:[%s154 + $0x78] sm:$0xff]
        %v198 = vld [vmem:[%s154 + $0x80] sm:$0xf]
        %v199 = vld [vmem:[%s154 + $0x84] sm:$0xff]
        %v200 = vld [vmem:[%s154 + $0x8c] sm:$0xf]
        %v201 = vld [vmem:[%s154 + $0x90] sm:$0xff]
        %v202 = vld [vmem:[%s154 + $0x98] sm:$0xf]
        %v203 = vld [vmem:[%s154 + $0x9c] sm:$0xff]
        %v204 = vld [vmem:[%s154 + $0xa4] sm:$0xf]
        %v205 = vld [vmem:[%s154 + $0xa8] sm:$0xff]
        %v206 = vld [vmem:[%s154 + $0xb0] sm:$0xf]
        %v207 = vld [vmem:[%s154 + $0xb4] sm:$0xff]
        %v208 = vld [vmem:[%s154 + $0xbc] sm:$0xf]
        %v209 = vunpack.c.l.bf16 %v177
        %v210 = vunpack.c.h.bf16 %v177
        %v211 = vunpack.c.l.bf16 %v178
        %v212 = vunpack.c.l.bf16 %v179
        %v213 = vunpack.c.h.bf16 %v179
        %v214 = vunpack.c.l.bf16 %v180
        %v215 = vunpack.c.l.bf16 %v181
        %v216 = vunpack.c.h.bf16 %v181
        %v217 = vunpack.c.l.bf16 %v182
        %v218 = vunpack.c.l.bf16 %v183
        %v219 = vunpack.c.h.bf16 %v183
        %v220 = vunpack.c.l.bf16 %v184
        %v221 = vunpack.c.l.bf16 %v185
        %v222 = vunpack.c.h.bf16 %v185
        %v223 = vunpack.c.l.bf16 %v186
        %v224 = vunpack.c.l.bf16 %v187
        %v225 = vunpack.c.h.bf16 %v187
        %v226 = vunpack.c.l.bf16 %v188
        %v227 = vunpack.c.l.bf16 %v189
        %v228 = vunpack.c.h.bf16 %v189
        %v229 = vunpack.c.l.bf16 %v190
        %v230 = vunpack.c.l.bf16 %v191
        %v231 = vunpack.c.h.bf16 %v191
        %v232 = vunpack.c.l.bf16 %v192
        %v233 = vunpack.c.l.bf16 %v193
        %v234 = vunpack.c.h.bf16 %v193
        %v235 = vunpack.c.l.bf16 %v194
        %v236 = vunpack.c.l.bf16 %v195
        %v237 = vunpack.c.h.bf16 %v195
        %v238 = vunpack.c.l.bf16 %v196
        %v239 = vunpack.c.l.bf16 %v197
        %v240 = vunpack.c.h.bf16 %v197
        %v241 = vunpack.c.l.bf16 %v198
        %v242 = vunpack.c.l.bf16 %v199
        %v243 = vunpack.c.h.bf16 %v199
        %v244 = vunpack.c.l.bf16 %v200
        %v245 = vunpack.c.l.bf16 %v201
        %v246 = vunpack.c.h.bf16 %v201
        %v247 = vunpack.c.l.bf16 %v202
        %v248 = vunpack.c.l.bf16 %v203
        %v249 = vunpack.c.h.bf16 %v203
        %v250 = vunpack.c.l.bf16 %v204
        %v251 = vunpack.c.l.bf16 %v205
        %v252 = vunpack.c.h.bf16 %v205
        %v253 = vunpack.c.l.bf16 %v206
        %v254 = vunpack.c.l.bf16 %v207
        %v255 = vunpack.c.h.bf16 %v207
        %v256 = vunpack.c.l.bf16 %v208
        %v257 = vld [vmem:[#allocation2] sm:$0xf]
        %258 = vmatprep.subr.mxu0 %v255
        %259 = vmatpush1.msra.mxu0 %v254
        %260 = vmatprep.subr.mxu0 %v252
        %261 = vmatpush1.msra.mxu0 %v251
        %262 = vmatprep.subr.mxu0 %v249
        %263 = vmatpush1.msra.mxu0 %v248
        %264 = vmatprep.subr.mxu0 %v246
        %265 = vmatpush1.msra.mxu0 %v245
        %266 = vmatprep.subr.mxu0 %v243
        %267 = vmatpush1.msra.mxu0 %v242
        %268 = vmatprep.subr.mxu0 %v240
        %269 = vmatpush1.msra.mxu0 %v239
        %270 = vmatprep.subr.mxu0 %v237
        %271 = vmatpush1.msra.mxu0 %v236
        %272 = vmatprep.subr.mxu0 %v234
        %273 = vmatpush1.msra.mxu0 %v233
        %274 = vmatprep.subr.mxu0 %v231
        %275 = vmatpush1.msra.mxu0 %v230
        %276 = vmatprep.subr.mxu0 %v228
        %277 = vmatpush1.msra.mxu0 %v227
        %278 = vmatprep.subr.mxu0 %v225
        %279 = vmatpush1.msra.mxu0 %v224
        %280 = vmatprep.subr.mxu0 %v222
        %281 = vmatpush1.msra.mxu0 %v221
        %282 = vmatprep.subr.mxu0 %v219
        %283 = vmatpush1.msra.mxu0 %v218
        %284 = vmatprep.subr.mxu0 %v216
        %285 = vmatpush1.msra.mxu0 %v215
        %286 = vmatprep.subr.mxu0 %v213
        %287 = vmatpush1.msra.mxu0 %v212
        %288 = vmatprep.subr.mxu0 %v210
        %289 = vmatpush1.msra.mxu0 %v209
        %290 = vmatprep.subr.mxu0 0.0
        %291 = vmatpush2.msra.mxu0 0.0
        %292 = vmatprep.subr.mxu0 0.0
        %293 = vmatpush2.msra.mxu0 0.0
        %294 = vmatprep.subr.mxu0 0.0
        %295 = vmatpush2.msra.mxu0 0.0
        %296 = vmatprep.subr.mxu0 0.0
        %297 = vmatpush2.msra.mxu0 0.0
        %298 = vmatprep.subr.mxu0 0.0
        %299 = vmatpush2.msra.mxu0 0.0
        %300 = vmatprep.subr.mxu0 0.0
        %301 = vmatpush2.msra.mxu0 0.0
        %302 = vmatprep.subr.mxu0 0.0
        %303 = vmatpush2.msra.mxu0 0.0
        %304 = vmatprep.subr.mxu0 0.0
        %305 = vmatpush2.msra.mxu0 0.0
        %306 = vmatprep.subr.mxu0 0.0
        %307 = vmatpush2.msra.mxu0 0.0
        %308 = vmatprep.subr.mxu0 0.0
        %309 = vmatpush2.msra.mxu0 0.0
        %310 = vmatprep.subr.mxu0 0.0
        %311 = vmatpush2.msra.mxu0 0.0
        %312 = vmatprep.subr.mxu0 0.0
        %313 = vmatpush2.msra.mxu0 0.0
        %314 = vmatprep.subr.mxu0 0.0
        %315 = vmatpush2.msra.mxu0 0.0
        %316 = vmatprep.subr.mxu0 0.0
        %317 = vmatpush2.msra.mxu0 0.0
        %318 = vmatprep.subr.mxu0 0.0
        %319 = vmatpush2.msra.mxu0 0.0
        %320 = vmatprep.subr.mxu0 0.0
        %321 = vmatpush2.msra.mxu0 0.0
        %322 = vmatprep.mubr.f32.mxu0 0.0
        %323 = vmatmul.mubr.f32.gmra.mxu0 %v257
        %v324 = vpop.f32.mrf.mxu0
        %v325 = vadd.f32 0.0, %v324
        %v326 = vpop.f32.mrf.mxu0
        %v327 = vadd.f32 0.0, %v326
        %328 = vdwg.mxu0
        %329 = vmatprep.subr.mxu0 0.0
        %330 = vmatpush1.msra.mxu0 %v256
        %331 = vmatprep.subr.mxu0 0.0
        %332 = vmatpush1.msra.mxu0 %v253
        %333 = vmatprep.subr.mxu0 0.0
        %334 = vmatpush1.msra.mxu0 %v250
        %335 = vmatprep.subr.mxu0 0.0
        %336 = vmatpush1.msra.mxu0 %v247
        %337 = vmatprep.subr.mxu0 0.0
        %338 = vmatpush1.msra.mxu0 %v244
        %339 = vmatprep.subr.mxu0 0.0
        %340 = vmatpush1.msra.mxu0 %v241
        %341 = vmatprep.subr.mxu0 0.0
        %342 = vmatpush1.msra.mxu0 %v238
        %343 = vmatprep.subr.mxu0 0.0
        %344 = vmatpush1.msra.mxu0 %v235
        %345 = vmatprep.subr.mxu0 0.0
        %346 = vmatpush1.msra.mxu0 %v232
        %347 = vmatprep.subr.mxu0 0.0
        %348 = vmatpush1.msra.mxu0 %v229
        %349 = vmatprep.subr.mxu0 0.0
        %350 = vmatpush1.msra.mxu0 %v226
        %351 = vmatprep.subr.mxu0 0.0
        %352 = vmatpush1.msra.mxu0 %v223
        %353 = vmatprep.subr.mxu0 0.0
        %354 = vmatpush1.msra.mxu0 %v220
        %355 = vmatprep.subr.mxu0 0.0
        %356 = vmatpush1.msra.mxu0 %v217
        %357 = vmatprep.subr.mxu0 0.0
        %358 = vmatpush1.msra.mxu0 %v214
        %359 = vmatprep.subr.mxu0 0.0
        %360 = vmatpush1.msra.mxu0 %v211
        %361 = vmatprep.subr.mxu0 0.0
        %362 = vmatpush2.msra.mxu0 0.0
        %363 = vmatprep.subr.mxu0 0.0
        %364 = vmatpush2.msra.mxu0 0.0
        %365 = vmatprep.subr.mxu0 0.0
        %366 = vmatpush2.msra.mxu0 0.0
        %367 = vmatprep.subr.mxu0 0.0
        %368 = vmatpush2.msra.mxu0 0.0
        %369 = vmatprep.subr.mxu0 0.0
        %370 = vmatpush2.msra.mxu0 0.0
        %371 = vmatprep.subr.mxu0 0.0
        %372 = vmatpush2.msra.mxu0 0.0
        %373 = vmatprep.subr.mxu0 0.0
        %374 = vmatpush2.msra.mxu0 0.0
        %375 = vmatprep.subr.mxu0 0.0
        %376 = vmatpush2.msra.mxu0 0.0
        %377 = vmatprep.subr.mxu0 0.0
        %378 = vmatpush2.msra.mxu0 0.0
        %379 = vmatprep.subr.mxu0 0.0
        %380 = vmatpush2.msra.mxu0 0.0
        %381 = vmatprep.subr.mxu0 0.0
        %382 = vmatpush2.msra.mxu0 0.0
        %383 = vmatprep.subr.mxu0 0.0
        %384 = vmatpush2.msra.mxu0 0.0
        %385 = vmatprep.subr.mxu0 0.0
        %386 = vmatpush2.msra.mxu0 0.0
        %387 = vmatprep.subr.mxu0 0.0
        %388 = vmatpush2.msra.mxu0 0.0
        %389 = vmatprep.subr.mxu0 0.0
        %390 = vmatpush2.msra.mxu0 0.0
        %391 = vmatprep.subr.mxu0 0.0
        %392 = vmatpush2.msra.mxu0 0.0
        %393 = vmatprep.mubr.f32.mxu0 0.0
        %394 = vmatmul.mubr.f32.gmra.mxu0 %v257
        %v395 = vpop.f32.mrf.mxu0
        %v396 = vadd.f32 0.0, %v395
        %v397 = vpop.f32.mrf.mxu0
        %398 = vdwg.mxu0
        %v401 = vcombine.low %v325, %v327
        %403 = vst [vmem:[%s174] sm:$0xff] %v401
        %404 = vst [vmem:[%s174 + $0x8] sm:$0xf] %v396
        %s405 = sand.u32 %s75, 1
        %s406 = scalar_lea.sflag [#allocation4], %s405
        %s407 = sand.u32 %s75, 1
        %s408 = smul.addr %s407, 12
        %s409 = scalar_lea.vmem [#allocation7], %s408
        // Predicated region
        $region37: #{tpu_custom_call.1} parent=27 // pred_check
          %p410 = pneg %p85
        $region38: #{tpu_custom_call.1} parent=27 // pred_check_branch
          %412 = sbr.rel (%p410) target = $region40
        $region39: #{tpu_custom_call.1} parent=27 // pred_region
          %s413 = smul.u32 3, %s20
          %s415 = ssub.s32 192, 192
          %416 = vsyncadd %s406, %s415
          %s417 = smul.addr %s413, 64
          %s418 = scalar_lea.hbm %s2, %s417
          %s420 = sshll.u32 %s409, 4
          %s421 = int_to_ptr.vmem [resolvable:$true] %s420
          %423 = dma.vmem_to_hbm [thread:$0]  %s421, 192, %s418, %s406
        $region40: #{tpu_custom_call.1} parent=27 // pred_fallthru
          _
      $region28: #{tpu_custom_call.1} parent=5 // pred_fallthru
        _
      %p424 = scmp.le.s32.totalorder 2, %s15
      // Predicated region
      $region41: #{tpu_custom_call.1} parent=5 // pred_check
        %p425 = pneg %p424
      $region42: #{tpu_custom_call.1} parent=5 // pred_check_branch
        %427 = sbr.rel (%p425) target = $region44
      $region43: #{tpu_custom_call.1} parent=5 // pred_region
        %s428 = ssub.s32 %s15, 2
        // Predicated region
        $region45: #{tpu_custom_call.1} parent=43 // pred_check
          %p429 = pneg %p91
        $region46: #{tpu_custom_call.1} parent=43 // pred_check_branch
          %431 = sbr.rel (%p429) target = $region48
        $region47: #{tpu_custom_call.1} parent=43 // pred_region
          %s432 = sand.u32 %s76, 1
          %s433 = scalar_lea.sflag [#allocation4], %s432
          %s434 = sand.u32 %s76, 1
          %s435 = smul.addr %s434, 12
          %s436 = scalar_lea.vmem [#allocation7], %s435
          %437 = dma.done %s433, 192
        $region48: #{tpu_custom_call.1} parent=43 // pred_fallthru
          _
      $region44: #{tpu_custom_call.1} parent=5 // pred_fallthru
        _
    $region6: #{tpu_custom_call.1} parent=1 // loop_footer
      %s19 = sadd.s32 1, %s15
    $region7: #{tpu_custom_call.1} parent=1 // loop_footer_branch
      %14 = sbr.rel target = $region3
    $region8: #{tpu_custom_call.1} parent=1 // loop_exit
      _
    %438 = vsyncpa [#allocation3], 1
    %s439 = scalar_lea.sflag [#allocation3], 1
    %440 = vsyncpa %s439, 1
    %441 = vsyncpa [#allocation6], 1
    %s442 = scalar_lea.sflag [#allocation6], 1
    %443 = vsyncpa %s442, 1
    %444 = vsyncpa [#allocation4], 1
    %s445 = scalar_lea.sflag [#allocation4], 1
    %446 = vsyncpa %s445, 1

</llo_original>
